<compile_context>
chip_gen: v5e
topology: v5e:2x2
jax: 0.10.0
libtpu: 0.0.40
codegen_flags: <defaults>
</compile_context>

<pallas_src>
import jax
import jax.numpy as jnp
from jax.experimental import pallas as pl
from jax.experimental.pallas import tpu as pltpu


def _anchor2vec_kernel(x_ref, anc_ref, vec_ref):
    """Processes one (batch b, anchor-side p, spatial chunk c) tile.

    x_ref:   (1, 1, R, s1, s2)  raw anchor logits for this (b, p, c)
    anc_ref: (1, R, 1, s1, s2)  permuted-logits output (pure copy; the permute
                                is done entirely by the output BlockSpec)
    vec_ref: (1, 1, s1, s2)     DFL expectation  sum_r r * softmax_r(x)
    """
    R = x_ref.shape[2]

    # Pass 1: per-bin pass-through copy + running max.
    #  - copy per bin keeps live ranges to one (s1, s2) slab (no big f32 temp);
    #    each store is a full lane-dense slab, so the vst pattern is identical
    #    to a whole-block copy (no extra masking).
    #  - max in the raw dtype is exact (bf16 / f32), so no f32 tile is needed.
    x0 = x_ref[0, 0, 0, :, :]
    anc_ref[0, 0, 0, :, :] = x0
    m = x0
    for r in range(1, R):
        xr = x_ref[0, 0, r, :, :]
        anc_ref[0, r, 0, :, :] = xr
        m = jnp.maximum(m, xr)
    m = m.astype(jnp.float32)

    # Pass 2: numerically stable softmax over the R bins + expectation against
    # the frozen arange(R) Conv3d weight.  Fully unrolled (R is small, e.g. 16);
    # exp goes to the EUP, the rest stays on the VPU; only one f32 bin slab is
    # live per iteration.
    den = jnp.zeros(m.shape, jnp.float32)
    num = jnp.zeros(m.shape, jnp.float32)
    for r in range(R):
        e = jnp.exp(x_ref[0, 0, r, :, :].astype(jnp.float32) - m)   # EUP
        den = den + e
        if r:                                   # r == 0 contributes 0 * e
            num = num + jnp.float32(r) * e      # frozen conv weight = r

    # EUP approx reciprocal + one Newton step => full f32 accuracy without the
    # long-latency VALU divide.
    inv = pl.reciprocal(den, approx=True)
    inv = inv * (2.0 - den * inv)
    vec_ref[0, 0, :, :] = (num * inv).astype(vec_ref.dtype)


def _divisors(n):
    small, large = [], []
    d = 1
    while d * d <= n:
        if n % d == 0:
            small.append(d)
            if d != n // d:
                large.append(n // d)
        d += 1
    return small + large[::-1]


def _spatial_layout(hw, base_steps, sublane_multiple):
    """Factor hw = n_chunks * s1 * s2 for lane/sublane-dense VMEM tiles.

    s2 maps to vreg lanes (want a multiple of 128), s1 to sublanes (want a
    multiple of 8/16 depending on dtype packing).  n_chunks becomes an extra
    'parallel' grid axis, used only when it costs no vreg density, each chunk
    stays large enough to amortise per-step overhead, and chunk blocks remain
    (8,128)-aligned (small heads stay unsplit).
    """
    def density(n, t):
        return n / float(-(-n // t) * t)

    best_key, best = None, None
    for s2 in _divisors(hw):
        rest = hw // s2
        for s1 in _divisors(rest):
            c = rest // s1
            chunk = s1 * s2
            if c > 1 and (c > 6 or s1 % sublane_multiple or chunk < 4096):
                continue
            key = (
                round(density(s1, sublane_multiple) * density(s2, 128), 6),
                min(base_steps * c, 8),        # >= 4 pipeline steps per TC
                1 if chunk <= 8192 else 0,     # keep live f32 compute slab modest
                s2,                            # longer lane runs as tie-break
            )
            if best_key is None or key > best_key:
                best_key, best = key, (c, s1, s2)
    return best


@jax.jit
def anchor2vec_forward(anchor_x):
    """Anchor2Vec forward.

    anchor_x: (B, 4*R, h, w)  ->  (anchor (B, R, 4, h, w), vector (B, 4, h, w))
    """
    B, PR, h, w = anchor_x.shape
    P = 4
    R = PR // P
    hw = h * w
    itemsize = anchor_x.dtype.itemsize
    sub_mult = max(8, 32 // max(itemsize, 1))       # 8 f32, 16 bf16, 32 int8
    C, s1, s2 = _spatial_layout(hw, B * P, sub_mult)
    S1 = C * s1

    # Free row-major reshape: (h, w) -> lane-dense (S1, s2); no transpose / pad.
    x5 = anchor_x.reshape(B, P, R, S1, s2)

    cost = pl.CostEstimate(
        flops=5 * B * P * R * hw,
        transcendentals=B * P * R * hw,
        bytes_accessed=(2 * R + 1) * B * P * hw * itemsize,
    )

    # Explicit VMEM budget (deterministic on v7x's 64 MiB): double-buffered
    # in/anc/vec blocks + f32 compute slabs + slack, clamped to a safe range.
    block_bytes = (2 * R + 1) * s1 * s2 * itemsize + 6 * s1 * s2 * 4
    vmem_limit = int(min(max(2 * block_bytes + (2 << 20), 16 << 20), 48 << 20))

    anc, vec = pl.pallas_call(
        _anchor2vec_kernel,
        out_shape=(
            jax.ShapeDtypeStruct((B, R, P, S1, s2), anchor_x.dtype),
            jax.ShapeDtypeStruct((B, P, S1, s2), anchor_x.dtype),
        ),
        grid_spec=pltpu.PrefetchScalarGridSpec(
            num_scalar_prefetch=0,
            grid=(B, P, C),
            in_specs=[
                pl.BlockSpec((1, 1, R, s1, s2), lambda b, p, c: (b, p, 0, c, 0)),
            ],
            out_specs=[
                # The (B,P,R,.) -> (B,R,P,.) permute happens right here.
                pl.BlockSpec((1, R, 1, s1, s2), lambda b, p, c: (b, 0, p, c, 0)),
                pl.BlockSpec((1, 1, s1, s2), lambda b, p, c: (b, p, c, 0)),
            ],
        ),
        compiler_params=pltpu.CompilerParams(
            dimension_semantics=("parallel", "parallel", "parallel"),
            vmem_limit_bytes=vmem_limit,
        ),
        cost_estimate=cost,
    )(x5)

    # Free row-major reshapes back to the module's output shapes.
    return anc.reshape(B, R, P, h, w), vec.reshape(B, P, h, w)


def _reference_forward(anchor_x):
    """Pure-JAX reference matching the PyTorch module."""
    B, PR, h, w = anchor_x.shape
    P = 4
    R = PR // P
    anc = jnp.transpose(anchor_x.reshape(B, P, R, h, w), (0, 2, 1, 3, 4))
    prob = jax.nn.softmax(anc.astype(jnp.float32), axis=1)
    rng = jnp.arange(R, dtype=jnp.float32).reshape(1, R, 1, 1, 1)
    vec = jnp.sum(prob * rng, axis=1).astype(anchor_x.dtype)
    return anc, vec


def _check_case(key, B, reg_max, h, w, dtype, atol, rtol):
    x = jax.random.normal(key, (B, 4 * reg_max, h, w), jnp.float32).astype(dtype)
    anc, vec = anchor2vec_forward(x)
    anc = jax.block_until_ready(anc)
    vec = jax.block_until_ready(vec)

    ref_anc, ref_vec = _reference_forward(x)
    assert anc.shape == (B, reg_max, 4, h, w)
    assert vec.shape == (B, 4, h, w)
    assert jnp.array_equal(anc, ref_anc), "anchor permute mismatch"
    v = vec.astype(jnp.float32)
    rv = ref_vec.astype(jnp.float32)
    assert jnp.allclose(v, rv, atol=atol, rtol=rtol), (
        f"max abs diff {jnp.max(jnp.abs(v - rv))}")


if __name__ == "__main__":
    key = jax.random.PRNGKey(0)
    keys = jax.random.split(key, 3)
    # Primary small smoke test plus two real YOLO head shapes that exercise the
    # non-128-divisible spatial path (20x20) and the chunked-grid path (160x160).
    _check_case(keys[0], 2, 16, 16, 16, jnp.float32, 1e-4, 1e-4)
    _check_case(keys[1], 1, 16, 20, 20, jnp.float32, 1e-4, 1e-4)
    _check_case(keys[2], 1, 16, 160, 160, jnp.float32, 1e-4, 1e-4)
    print("KERNEL_OK")
</pallas_src>

<mosaic_0001>
module attributes {stable_mosaic.version = 11 : i64} {
  func.func @_anchor2vec_kernel(%arg0: i32, %arg1: i32, %arg2: i32, %arg3: memref<1x1x16x2x128xf32, #tpu.memory_space<vmem>>, %arg4: memref<1x16x1x2x128xf32, #tpu.memory_space<vmem>>, %arg5: memref<1x1x2x128xf32, #tpu.memory_space<vmem>>) attributes {dimension_semantics = [#tpu.dimension_semantics<parallel>, #tpu.dimension_semantics<parallel>, #tpu.dimension_semantics<parallel>], iteration_bounds = array<i64: 2, 4, 1>, scalar_prefetch = 0 : i64, scratch_operands = 0 : i64, tpu.core_type = #tpu.core_type<tc>, window_params = [{transform_indices = @transform_0, window_bounds = array<i64: 1, 1, 16, 2, 128>}, {transform_indices = @transform_1, window_bounds = array<i64: 1, 16, 1, 2, 128>}, {transform_indices = @transform_2, window_bounds = array<i64: 1, 1, 2, 128>}]} {
    %c0 = arith.constant 0 : index
    %c0_0 = arith.constant 0 : index
    %c0_1 = arith.constant 0 : index
    %c0_2 = arith.constant 0 : index
    %c0_3 = arith.constant 0 : index
    %0 = vector.load %arg3[%c0, %c0_0, %c0_1, %c0_2, %c0_3] : memref<1x1x16x2x128xf32, #tpu.memory_space<vmem>>, vector<1x1x1x2x128xf32>
    %1 = vector.shape_cast %0 : vector<1x1x1x2x128xf32> to vector<2x128xf32>
    %c0_4 = arith.constant 0 : index
    %c0_5 = arith.constant 0 : index
    %c0_6 = arith.constant 0 : index
    %c0_7 = arith.constant 0 : index
    %c0_8 = arith.constant 0 : index
    %2 = vector.load %arg4[%c0_4, %c0_5, %c0_6, %c0_7, %c0_8] : memref<1x16x1x2x128xf32, #tpu.memory_space<vmem>>, vector<1x1x1x2x128xf32>
    %3 = vector.shape_cast %2 : vector<1x1x1x2x128xf32> to vector<2x128xf32>
    %4 = vector.shape_cast %1 : vector<2x128xf32> to vector<1x1x1x2x128xf32>
    tpu.vector_store %arg4[%c0_4, %c0_5, %c0_6, %c0_7, %c0_8], %4 {strides = array<i32>} : memref<1x16x1x2x128xf32, #tpu.memory_space<vmem>>, vector<1x1x1x2x128xf32>,
    %c0_9 = arith.constant 0 : index
    %c0_10 = arith.constant 0 : index
    %c1 = arith.constant 1 : index
    %c0_11 = arith.constant 0 : index
    %c0_12 = arith.constant 0 : index
    %5 = vector.load %arg3[%c0_9, %c0_10, %c1, %c0_11, %c0_12] : memref<1x1x16x2x128xf32, #tpu.memory_space<vmem>>, vector<1x1x1x2x128xf32>
    %6 = vector.shape_cast %5 : vector<1x1x1x2x128xf32> to vector<2x128xf32>
    %c0_13 = arith.constant 0 : index
    %c1_14 = arith.constant 1 : index
    %c0_15 = arith.constant 0 : index
    %c0_16 = arith.constant 0 : index
    %c0_17 = arith.constant 0 : index
    %7 = vector.load %arg4[%c0_13, %c1_14, %c0_15, %c0_16, %c0_17] : memref<1x16x1x2x128xf32, #tpu.memory_space<vmem>>, vector<1x1x1x2x128xf32>
    %8 = vector.shape_cast %7 : vector<1x1x1x2x128xf32> to vector<2x128xf32>
    %9 = vector.shape_cast %6 : vector<2x128xf32> to vector<1x1x1x2x128xf32>
    tpu.vector_store %arg4[%c0_13, %c1_14, %c0_15, %c0_16, %c0_17], %9 {strides = array<i32>} : memref<1x16x1x2x128xf32, #tpu.memory_space<vmem>>, vector<1x1x1x2x128xf32>,
    %10 = arith.maximumf %1, %6 : vector<2x128xf32>
    %c0_18 = arith.constant 0 : index
    %c0_19 = arith.constant 0 : index
    %c2 = arith.constant 2 : index
    %c0_20 = arith.constant 0 : index
    %c0_21 = arith.constant 0 : index
    %11 = vector.load %arg3[%c0_18, %c0_19, %c2, %c0_20, %c0_21] : memref<1x1x16x2x128xf32, #tpu.memory_space<vmem>>, vector<1x1x1x2x128xf32>
    %12 = vector.shape_cast %11 : vector<1x1x1x2x128xf32> to vector<2x128xf32>
    %c0_22 = arith.constant 0 : index
    %c2_23 = arith.constant 2 : index
    %c0_24 = arith.constant 0 : index
    %c0_25 = arith.constant 0 : index
    %c0_26 = arith.constant 0 : index
    %13 = vector.load %arg4[%c0_22, %c2_23, %c0_24, %c0_25, %c0_26] : memref<1x16x1x2x128xf32, #tpu.memory_space<vmem>>, vector<1x1x1x2x128xf32>
    %14 = vector.shape_cast %13 : vector<1x1x1x2x128xf32> to vector<2x128xf32>
    %15 = vector.shape_cast %12 : vector<2x128xf32> to vector<1x1x1x2x128xf32>
    tpu.vector_store %arg4[%c0_22, %c2_23, %c0_24, %c0_25, %c0_26], %15 {strides = array<i32>} : memref<1x16x1x2x128xf32, #tpu.memory_space<vmem>>, vector<1x1x1x2x128xf32>,
    %16 = arith.maximumf %10, %12 : vector<2x128xf32>
    %c0_27 = arith.constant 0 : index
    %c0_28 = arith.constant 0 : index
    %c3 = arith.constant 3 : index
    %c0_29 = arith.constant 0 : index
    %c0_30 = arith.constant 0 : index
    %17 = vector.load %arg3[%c0_27, %c0_28, %c3, %c0_29, %c0_30] : memref<1x1x16x2x128xf32, #tpu.memory_space<vmem>>, vector<1x1x1x2x128xf32>
    %18 = vector.shape_cast %17 : vector<1x1x1x2x128xf32> to vector<2x128xf32>
    %c0_31 = arith.constant 0 : index
    %c3_32 = arith.constant 3 : index
    %c0_33 = arith.constant 0 : index
    %c0_34 = arith.constant 0 : index
    %c0_35 = arith.constant 0 : index
    %19 = vector.load %arg4[%c0_31, %c3_32, %c0_33, %c0_34, %c0_35] : memref<1x16x1x2x128xf32, #tpu.memory_space<vmem>>, vector<1x1x1x2x128xf32>
    %20 = vector.shape_cast %19 : vector<1x1x1x2x128xf32> to vector<2x128xf32>
    %21 = vector.shape_cast %18 : vector<2x128xf32> to vector<1x1x1x2x128xf32>
    tpu.vector_store %arg4[%c0_31, %c3_32, %c0_33, %c0_34, %c0_35], %21 {strides = array<i32>} : memref<1x16x1x2x128xf32, #tpu.memory_space<vmem>>, vector<1x1x1x2x128xf32>,
    %22 = arith.maximumf %16, %18 : vector<2x128xf32>
    %c0_36 = arith.constant 0 : index
    %c0_37 = arith.constant 0 : index
    %c4 = arith.constant 4 : index
    %c0_38 = arith.constant 0 : index
    %c0_39 = arith.constant 0 : index
    %23 = vector.load %arg3[%c0_36, %c0_37, %c4, %c0_38, %c0_39] : memref<1x1x16x2x128xf32, #tpu.memory_space<vmem>>, vector<1x1x1x2x128xf32>
    %24 = vector.shape_cast %23 : vector<1x1x1x2x128xf32> to vector<2x128xf32>
    %c0_40 = arith.constant 0 : index
    %c4_41 = arith.constant 4 : index
    %c0_42 = arith.constant 0 : index
    %c0_43 = arith.constant 0 : index
    %c0_44 = arith.constant 0 : index
    %25 = vector.load %arg4[%c0_40, %c4_41, %c0_42, %c0_43, %c0_44] : memref<1x16x1x2x128xf32, #tpu.memory_space<vmem>>, vector<1x1x1x2x128xf32>
    %26 = vector.shape_cast %25 : vector<1x1x1x2x128xf32> to vector<2x128xf32>
    %27 = vector.shape_cast %24 : vector<2x128xf32> to vector<1x1x1x2x128xf32>
    tpu.vector_store %arg4[%c0_40, %c4_41, %c0_42, %c0_43, %c0_44], %27 {strides = array<i32>} : memref<1x16x1x2x128xf32, #tpu.memory_space<vmem>>, vector<1x1x1x2x128xf32>,
    %28 = arith.maximumf %22, %24 : vector<2x128xf32>
    %c0_45 = arith.constant 0 : index
    %c0_46 = arith.constant 0 : index
    %c5 = arith.constant 5 : index
    %c0_47 = arith.constant 0 : index
    %c0_48 = arith.constant 0 : index
    %29 = vector.load %arg3[%c0_45, %c0_46, %c5, %c0_47, %c0_48] : memref<1x1x16x2x128xf32, #tpu.memory_space<vmem>>, vector<1x1x1x2x128xf32>
    %30 = vector.shape_cast %29 : vector<1x1x1x2x128xf32> to vector<2x128xf32>
    %c0_49 = arith.constant 0 : index
    %c5_50 = arith.constant 5 : index
    %c0_51 = arith.constant 0 : index
    %c0_52 = arith.constant 0 : index
    %c0_53 = arith.constant 0 : index
    %31 = vector.load %arg4[%c0_49, %c5_50, %c0_51, %c0_52, %c0_53] : memref<1x16x1x2x128xf32, #tpu.memory_space<vmem>>, vector<1x1x1x2x128xf32>
    %32 = vector.shape_cast %31 : vector<1x1x1x2x128xf32> to vector<2x128xf32>
    %33 = vector.shape_cast %30 : vector<2x128xf32> to vector<1x1x1x2x128xf32>
    tpu.vector_store %arg4[%c0_49, %c5_50, %c0_51, %c0_52, %c0_53], %33 {strides = array<i32>} : memref<1x16x1x2x128xf32, #tpu.memory_space<vmem>>, vector<1x1x1x2x128xf32>,
    %34 = arith.maximumf %28, %30 : vector<2x128xf32>
    %c0_54 = arith.constant 0 : index
    %c0_55 = arith.constant 0 : index
    %c6 = arith.constant 6 : index
    %c0_56 = arith.constant 0 : index
    %c0_57 = arith.constant 0 : index
    %35 = vector.load %arg3[%c0_54, %c0_55, %c6, %c0_56, %c0_57] : memref<1x1x16x2x128xf32, #tpu.memory_space<vmem>>, vector<1x1x1x2x128xf32>
    %36 = vector.shape_cast %35 : vector<1x1x1x2x128xf32> to vector<2x128xf32>
    %c0_58 = arith.constant 0 : index
    %c6_59 = arith.constant 6 : index
    %c0_60 = arith.constant 0 : index
    %c0_61 = arith.constant 0 : index
    %c0_62 = arith.constant 0 : index
    %37 = vector.load %arg4[%c0_58, %c6_59, %c0_60, %c0_61, %c0_62] : memref<1x16x1x2x128xf32, #tpu.memory_space<vmem>>, vector<1x1x1x2x128xf32>
    %38 = vector.shape_cast %37 : vector<1x1x1x2x128xf32> to vector<2x128xf32>
    %39 = vector.shape_cast %36 : vector<2x128xf32> to vector<1x1x1x2x128xf32>
    tpu.vector_store %arg4[%c0_58, %c6_59, %c0_60, %c0_61, %c0_62], %39 {strides = array<i32>} : memref<1x16x1x2x128xf32, #tpu.memory_space<vmem>>, vector<1x1x1x2x128xf32>,
    %40 = arith.maximumf %34, %36 : vector<2x128xf32>
    %c0_63 = arith.constant 0 : index
    %c0_64 = arith.constant 0 : index
    %c7 = arith.constant 7 : index
    %c0_65 = arith.constant 0 : index
    %c0_66 = arith.constant 0 : index
    %41 = vector.load %arg3[%c0_63, %c0_64, %c7, %c0_65, %c0_66] : memref<1x1x16x2x128xf32, #tpu.memory_space<vmem>>, vector<1x1x1x2x128xf32>
    %42 = vector.shape_cast %41 : vector<1x1x1x2x128xf32> to vector<2x128xf32>
    %c0_67 = arith.constant 0 : index
    %c7_68 = arith.constant 7 : index
    %c0_69 = arith.constant 0 : index
    %c0_70 = arith.constant 0 : index
    %c0_71 = arith.constant 0 : index
    %43 = vector.load %arg4[%c0_67, %c7_68, %c0_69, %c0_70, %c0_71] : memref<1x16x1x2x128xf32, #tpu.memory_space<vmem>>, vector<1x1x1x2x128xf32>
    %44 = vector.shape_cast %43 : vector<1x1x1x2x128xf32> to vector<2x128xf32>
    %45 = vector.shape_cast %42 : vector<2x128xf32> to vector<1x1x1x2x128xf32>
    tpu.vector_store %arg4[%c0_67, %c7_68, %c0_69, %c0_70, %c0_71], %45 {strides = array<i32>} : memref<1x16x1x2x128xf32, #tpu.memory_space<vmem>>, vector<1x1x1x2x128xf32>,
    %46 = arith.maximumf %40, %42 : vector<2x128xf32>
    %c0_72 = arith.constant 0 : index
    %c0_73 = arith.constant 0 : index
    %c8 = arith.constant 8 : index
    %c0_74 = arith.constant 0 : index
    %c0_75 = arith.constant 0 : index
    %47 = vector.load %arg3[%c0_72, %c0_73, %c8, %c0_74, %c0_75] : memref<1x1x16x2x128xf32, #tpu.memory_space<vmem>>, vector<1x1x1x2x128xf32>
    %48 = vector.shape_cast %47 : vector<1x1x1x2x128xf32> to vector<2x128xf32>
    %c0_76 = arith.constant 0 : index
    %c8_77 = arith.constant 8 : index
    %c0_78 = arith.constant 0 : index
    %c0_79 = arith.constant 0 : index
    %c0_80 = arith.constant 0 : index
    %49 = vector.load %arg4[%c0_76, %c8_77, %c0_78, %c0_79, %c0_80] : memref<1x16x1x2x128xf32, #tpu.memory_space<vmem>>, vector<1x1x1x2x128xf32>
    %50 = vector.shape_cast %49 : vector<1x1x1x2x128xf32> to vector<2x128xf32>
    %51 = vector.shape_cast %48 : vector<2x128xf32> to vector<1x1x1x2x128xf32>
    tpu.vector_store %arg4[%c0_76, %c8_77, %c0_78, %c0_79, %c0_80], %51 {strides = array<i32>} : memref<1x16x1x2x128xf32, #tpu.memory_space<vmem>>, vector<1x1x1x2x128xf32>,
    %52 = arith.maximumf %46, %48 : vector<2x128xf32>
    %c0_81 = arith.constant 0 : index
    %c0_82 = arith.constant 0 : index
    %c9 = arith.constant 9 : index
    %c0_83 = arith.constant 0 : index
    %c0_84 = arith.constant 0 : index
    %53 = vector.load %arg3[%c0_81, %c0_82, %c9, %c0_83, %c0_84] : memref<1x1x16x2x128xf32, #tpu.memory_space<vmem>>, vector<1x1x1x2x128xf32>
    %54 = vector.shape_cast %53 : vector<1x1x1x2x128xf32> to vector<2x128xf32>
    %c0_85 = arith.constant 0 : index
    %c9_86 = arith.constant 9 : index
    %c0_87 = arith.constant 0 : index
    %c0_88 = arith.constant 0 : index
    %c0_89 = arith.constant 0 : index
    %55 = vector.load %arg4[%c0_85, %c9_86, %c0_87, %c0_88, %c0_89] : memref<1x16x1x2x128xf32, #tpu.memory_space<vmem>>, vector<1x1x1x2x128xf32>
    %56 = vector.shape_cast %55 : vector<1x1x1x2x128xf32> to vector<2x128xf32>
    %57 = vector.shape_cast %54 : vector<2x128xf32> to vector<1x1x1x2x128xf32>
    tpu.vector_store %arg4[%c0_85, %c9_86, %c0_87, %c0_88, %c0_89], %57 {strides = array<i32>} : memref<1x16x1x2x128xf32, #tpu.memory_space<vmem>>, vector<1x1x1x2x128xf32>,
    %58 = arith.maximumf %52, %54 : vector<2x128xf32>
    %c0_90 = arith.constant 0 : index
    %c0_91 = arith.constant 0 : index
    %c10 = arith.constant 10 : index
    %c0_92 = arith.constant 0 : index
    %c0_93 = arith.constant 0 : index
    %59 = vector.load %arg3[%c0_90, %c0_91, %c10, %c0_92, %c0_93] : memref<1x1x16x2x128xf32, #tpu.memory_space<vmem>>, vector<1x1x1x2x128xf32>
    %60 = vector.shape_cast %59 : vector<1x1x1x2x128xf32> to vector<2x128xf32>
    %c0_94 = arith.constant 0 : index
    %c10_95 = arith.constant 10 : index
    %c0_96 = arith.constant 0 : index
    %c0_97 = arith.constant 0 : index
    %c0_98 = arith.constant 0 : index
    %61 = vector.load %arg4[%c0_94, %c10_95, %c0_96, %c0_97, %c0_98] : memref<1x16x1x2x128xf32, #tpu.memory_space<vmem>>, vector<1x1x1x2x128xf32>
    %62 = vector.shape_cast %61 : vector<1x1x1x2x128xf32> to vector<2x128xf32>
    %63 = vector.shape_cast %60 : vector<2x128xf32> to vector<1x1x1x2x128xf32>
    tpu.vector_store %arg4[%c0_94, %c10_95, %c0_96, %c0_97, %c0_98], %63 {strides = array<i32>} : memref<1x16x1x2x128xf32, #tpu.memory_space<vmem>>, vector<1x1x1x2x128xf32>,
    %64 = arith.maximumf %58, %60 : vector<2x128xf32>
    %c0_99 = arith.constant 0 : index
    %c0_100 = arith.constant 0 : index
    %c11 = arith.constant 11 : index
    %c0_101 = arith.constant 0 : index
    %c0_102 = arith.constant 0 : index
    %65 = vector.load %arg3[%c0_99, %c0_100, %c11, %c0_101, %c0_102] : memref<1x1x16x2x128xf32, #tpu.memory_space<vmem>>, vector<1x1x1x2x128xf32>
    %66 = vector.shape_cast %65 : vector<1x1x1x2x128xf32> to vector<2x128xf32>
    %c0_103 = arith.constant 0 : index
    %c11_104 = arith.constant 11 : index
    %c0_105 = arith.constant 0 : index
    %c0_106 = arith.constant 0 : index
    %c0_107 = arith.constant 0 : index
    %67 = vector.load %arg4[%c0_103, %c11_104, %c0_105, %c0_106, %c0_107] : memref<1x16x1x2x128xf32, #tpu.memory_space<vmem>>, vector<1x1x1x2x128xf32>
    %68 = vector.shape_cast %67 : vector<1x1x1x2x128xf32> to vector<2x128xf32>
    %69 = vector.shape_cast %66 : vector<2x128xf32> to vector<1x1x1x2x128xf32>
    tpu.vector_store %arg4[%c0_103, %c11_104, %c0_105, %c0_106, %c0_107], %69 {strides = array<i32>} : memref<1x16x1x2x128xf32, #tpu.memory_space<vmem>>, vector<1x1x1x2x128xf32>,
    %70 = arith.maximumf %64, %66 : vector<2x128xf32>
    %c0_108 = arith.constant 0 : index
    %c0_109 = arith.constant 0 : index
    %c12 = arith.constant 12 : index
    %c0_110 = arith.constant 0 : index
    %c0_111 = arith.constant 0 : index
    %71 = vector.load %arg3[%c0_108, %c0_109, %c12, %c0_110, %c0_111] : memref<1x1x16x2x128xf32, #tpu.memory_space<vmem>>, vector<1x1x1x2x128xf32>
    %72 = vector.shape_cast %71 : vector<1x1x1x2x128xf32> to vector<2x128xf32>
    %c0_112 = arith.constant 0 : index
    %c12_113 = arith.constant 12 : index
    %c0_114 = arith.constant 0 : index
    %c0_115 = arith.constant 0 : index
    %c0_116 = arith.constant 0 : index
    %73 = vector.load %arg4[%c0_112, %c12_113, %c0_114, %c0_115, %c0_116] : memref<1x16x1x2x128xf32, #tpu.memory_space<vmem>>, vector<1x1x1x2x128xf32>
    %74 = vector.shape_cast %73 : vector<1x1x1x2x128xf32> to vector<2x128xf32>
    %75 = vector.shape_cast %72 : vector<2x128xf32> to vector<1x1x1x2x128xf32>
    tpu.vector_store %arg4[%c0_112, %c12_113, %c0_114, %c0_115, %c0_116], %75 {strides = array<i32>} : memref<1x16x1x2x128xf32, #tpu.memory_space<vmem>>, vector<1x1x1x2x128xf32>,
    %76 = arith.maximumf %70, %72 : vector<2x128xf32>
    %c0_117 = arith.constant 0 : index
    %c0_118 = arith.constant 0 : index
    %c13 = arith.constant 13 : index
    %c0_119 = arith.constant 0 : index
    %c0_120 = arith.constant 0 : index
    %77 = vector.load %arg3[%c0_117, %c0_118, %c13, %c0_119, %c0_120] : memref<1x1x16x2x128xf32, #tpu.memory_space<vmem>>, vector<1x1x1x2x128xf32>
    %78 = vector.shape_cast %77 : vector<1x1x1x2x128xf32> to vector<2x128xf32>
    %c0_121 = arith.constant 0 : index
    %c13_122 = arith.constant 13 : index
    %c0_123 = arith.constant 0 : index
    %c0_124 = arith.constant 0 : index
    %c0_125 = arith.constant 0 : index
    %79 = vector.load %arg4[%c0_121, %c13_122, %c0_123, %c0_124, %c0_125] : memref<1x16x1x2x128xf32, #tpu.memory_space<vmem>>, vector<1x1x1x2x128xf32>
    %80 = vector.shape_cast %79 : vector<1x1x1x2x128xf32> to vector<2x128xf32>
    %81 = vector.shape_cast %78 : vector<2x128xf32> to vector<1x1x1x2x128xf32>
    tpu.vector_store %arg4[%c0_121, %c13_122, %c0_123, %c0_124, %c0_125], %81 {strides = array<i32>} : memref<1x16x1x2x128xf32, #tpu.memory_space<vmem>>, vector<1x1x1x2x128xf32>,
    %82 = arith.maximumf %76, %78 : vector<2x128xf32>
    %c0_126 = arith.constant 0 : index
    %c0_127 = arith.constant 0 : index
    %c14 = arith.constant 14 : index
    %c0_128 = arith.constant 0 : index
    %c0_129 = arith.constant 0 : index
    %83 = vector.load %arg3[%c0_126, %c0_127, %c14, %c0_128, %c0_129] : memref<1x1x16x2x128xf32, #tpu.memory_space<vmem>>, vector<1x1x1x2x128xf32>
    %84 = vector.shape_cast %83 : vector<1x1x1x2x128xf32> to vector<2x128xf32>
    %c0_130 = arith.constant 0 : index
    %c14_131 = arith.constant 14 : index
    %c0_132 = arith.constant 0 : index
    %c0_133 = arith.constant 0 : index
    %c0_134 = arith.constant 0 : index
    %85 = vector.load %arg4[%c0_130, %c14_131, %c0_132, %c0_133, %c0_134] : memref<1x16x1x2x128xf32, #tpu.memory_space<vmem>>, vector<1x1x1x2x128xf32>
    %86 = vector.shape_cast %85 : vector<1x1x1x2x128xf32> to vector<2x128xf32>
    %87 = vector.shape_cast %84 : vector<2x128xf32> to vector<1x1x1x2x128xf32>
    tpu.vector_store %arg4[%c0_130, %c14_131, %c0_132, %c0_133, %c0_134], %87 {strides = array<i32>} : memref<1x16x1x2x128xf32, #tpu.memory_space<vmem>>, vector<1x1x1x2x128xf32>,
    %88 = arith.maximumf %82, %84 : vector<2x128xf32>
    %c0_135 = arith.constant 0 : index
    %c0_136 = arith.constant 0 : index
    %c15 = arith.constant 15 : index
    %c0_137 = arith.constant 0 : index
    %c0_138 = arith.constant 0 : index
    %89 = vector.load %arg3[%c0_135, %c0_136, %c15, %c0_137, %c0_138] : memref<1x1x16x2x128xf32, #tpu.memory_space<vmem>>, vector<1x1x1x2x128xf32>
    %90 = vector.shape_cast %89 : vector<1x1x1x2x128xf32> to vector<2x128xf32>
    %c0_139 = arith.constant 0 : index
    %c15_140 = arith.constant 15 : index
    %c0_141 = arith.constant 0 : index
    %c0_142 = arith.constant 0 : index
    %c0_143 = arith.constant 0 : index
    %91 = vector.load %arg4[%c0_139, %c15_140, %c0_141, %c0_142, %c0_143] : memref<1x16x1x2x128xf32, #tpu.memory_space<vmem>>, vector<1x1x1x2x128xf32>
    %92 = vector.shape_cast %91 : vector<1x1x1x2x128xf32> to vector<2x128xf32>
    %93 = vector.shape_cast %90 : vector<2x128xf32> to vector<1x1x1x2x128xf32>
    tpu.vector_store %arg4[%c0_139, %c15_140, %c0_141, %c0_142, %c0_143], %93 {strides = array<i32>} : memref<1x16x1x2x128xf32, #tpu.memory_space<vmem>>, vector<1x1x1x2x128xf32>,
    %94 = arith.maximumf %88, %90 : vector<2x128xf32>
    %cst = arith.constant 0.000000e+00 : f32
    %95 = vector.broadcast %cst : f32 to vector<2x128xf32>
    %cst_144 = arith.constant 0.000000e+00 : f32
    %96 = vector.broadcast %cst_144 : f32 to vector<2x128xf32>
    %c0_145 = arith.constant 0 : index
    %c0_146 = arith.constant 0 : index
    %c0_147 = arith.constant 0 : index
    %c0_148 = arith.constant 0 : index
    %c0_149 = arith.constant 0 : index
    %97 = vector.load %arg3[%c0_145, %c0_146, %c0_147, %c0_148, %c0_149] : memref<1x1x16x2x128xf32, #tpu.memory_space<vmem>>, vector<1x1x1x2x128xf32>
    %98 = vector.shape_cast %97 : vector<1x1x1x2x128xf32> to vector<2x128xf32>
    %99 = arith.subf %98, %94 : vector<2x128xf32>
    %100 = math.exp %99 : vector<2x128xf32>
    %101 = arith.addf %95, %100 : vector<2x128xf32>
    %c0_150 = arith.constant 0 : index
    %c0_151 = arith.constant 0 : index
    %c1_152 = arith.constant 1 : index
    %c0_153 = arith.constant 0 : index
    %c0_154 = arith.constant 0 : index
    %102 = vector.load %arg3[%c0_150, %c0_151, %c1_152, %c0_153, %c0_154] : memref<1x1x16x2x128xf32, #tpu.memory_space<vmem>>, vector<1x1x1x2x128xf32>
    %103 = vector.shape_cast %102 : vector<1x1x1x2x128xf32> to vector<2x128xf32>
    %104 = arith.subf %103, %94 : vector<2x128xf32>
    %105 = math.exp %104 : vector<2x128xf32>
    %106 = arith.addf %101, %105 : vector<2x128xf32>
    %cst_155 = arith.constant 1.000000e+00 : f32
    %107 = vector.broadcast %cst_155 : f32 to vector<2x128xf32>
    %108 = arith.mulf %107, %105 : vector<2x128xf32>
    %109 = arith.addf %96, %108 : vector<2x128xf32>
    %c0_156 = arith.constant 0 : index
    %c0_157 = arith.constant 0 : index
    %c2_158 = arith.constant 2 : index
    %c0_159 = arith.constant 0 : index
    %c0_160 = arith.constant 0 : index
    %110 = vector.load %arg3[%c0_156, %c0_157, %c2_158, %c0_159, %c0_160] : memref<1x1x16x2x128xf32, #tpu.memory_space<vmem>>, vector<1x1x1x2x128xf32>
    %111 = vector.shape_cast %110 : vector<1x1x1x2x128xf32> to vector<2x128xf32>
    %112 = arith.subf %111, %94 : vector<2x128xf32>
    %113 = math.exp %112 : vector<2x128xf32>
    %114 = arith.addf %106, %113 : vector<2x128xf32>
    %cst_161 = arith.constant 2.000000e+00 : f32
    %115 = vector.broadcast %cst_161 : f32 to vector<2x128xf32>
    %116 = arith.mulf %115, %113 : vector<2x128xf32>
    %117 = arith.addf %109, %116 : vector<2x128xf32>
    %c0_162 = arith.constant 0 : index
    %c0_163 = arith.constant 0 : index
    %c3_164 = arith.constant 3 : index
    %c0_165 = arith.constant 0 : index
    %c0_166 = arith.constant 0 : index
    %118 = vector.load %arg3[%c0_162, %c0_163, %c3_164, %c0_165, %c0_166] : memref<1x1x16x2x128xf32, #tpu.memory_space<vmem>>, vector<1x1x1x2x128xf32>
    %119 = vector.shape_cast %118 : vector<1x1x1x2x128xf32> to vector<2x128xf32>
    %120 = arith.subf %119, %94 : vector<2x128xf32>
    %121 = math.exp %120 : vector<2x128xf32>
    %122 = arith.addf %114, %121 : vector<2x128xf32>
    %cst_167 = arith.constant 3.000000e+00 : f32
    %123 = vector.broadcast %cst_167 : f32 to vector<2x128xf32>
    %124 = arith.mulf %123, %121 : vector<2x128xf32>
    %125 = arith.addf %117, %124 : vector<2x128xf32>
    %c0_168 = arith.constant 0 : index
    %c0_169 = arith.constant 0 : index
    %c4_170 = arith.constant 4 : index
    %c0_171 = arith.constant 0 : index
    %c0_172 = arith.constant 0 : index
    %126 = vector.load %arg3[%c0_168, %c0_169, %c4_170, %c0_171, %c0_172] : memref<1x1x16x2x128xf32, #tpu.memory_space<vmem>>, vector<1x1x1x2x128xf32>
    %127 = vector.shape_cast %126 : vector<1x1x1x2x128xf32> to vector<2x128xf32>
    %128 = arith.subf %127, %94 : vector<2x128xf32>
    %129 = math.exp %128 : vector<2x128xf32>
    %130 = arith.addf %122, %129 : vector<2x128xf32>
    %cst_173 = arith.constant 4.000000e+00 : f32
    %131 = vector.broadcast %cst_173 : f32 to vector<2x128xf32>
    %132 = arith.mulf %131, %129 : vector<2x128xf32>
    %133 = arith.addf %125, %132 : vector<2x128xf32>
    %c0_174 = arith.constant 0 : index
    %c0_175 = arith.constant 0 : index
    %c5_176 = arith.constant 5 : index
    %c0_177 = arith.constant 0 : index
    %c0_178 = arith.constant 0 : index
    %134 = vector.load %arg3[%c0_174, %c0_175, %c5_176, %c0_177, %c0_178] : memref<1x1x16x2x128xf32, #tpu.memory_space<vmem>>, vector<1x1x1x2x128xf32>
    %135 = vector.shape_cast %134 : vector<1x1x1x2x128xf32> to vector<2x128xf32>
    %136 = arith.subf %135, %94 : vector<2x128xf32>
    %137 = math.exp %136 : vector<2x128xf32>
    %138 = arith.addf %130, %137 : vector<2x128xf32>
    %cst_179 = arith.constant 5.000000e+00 : f32
    %139 = vector.broadcast %cst_179 : f32 to vector<2x128xf32>
    %140 = arith.mulf %139, %137 : vector<2x128xf32>
    %141 = arith.addf %133, %140 : vector<2x128xf32>
    %c0_180 = arith.constant 0 : index
    %c0_181 = arith.constant 0 : index
    %c6_182 = arith.constant 6 : index
    %c0_183 = arith.constant 0 : index
    %c0_184 = arith.constant 0 : index
    %142 = vector.load %arg3[%c0_180, %c0_181, %c6_182, %c0_183, %c0_184] : memref<1x1x16x2x128xf32, #tpu.memory_space<vmem>>, vector<1x1x1x2x128xf32>
    %143 = vector.shape_cast %142 : vector<1x1x1x2x128xf32> to vector<2x128xf32>
    %144 = arith.subf %143, %94 : vector<2x128xf32>
    %145 = math.exp %144 : vector<2x128xf32>
    %146 = arith.addf %138, %145 : vector<2x128xf32>
    %cst_185 = arith.constant 6.000000e+00 : f32
    %147 = vector.broadcast %cst_185 : f32 to vector<2x128xf32>
    %148 = arith.mulf %147, %145 : vector<2x128xf32>
    %149 = arith.addf %141, %148 : vector<2x128xf32>
    %c0_186 = arith.constant 0 : index
    %c0_187 = arith.constant 0 : index
    %c7_188 = arith.constant 7 : index
    %c0_189 = arith.constant 0 : index
    %c0_190 = arith.constant 0 : index
    %150 = vector.load %arg3[%c0_186, %c0_187, %c7_188, %c0_189, %c0_190] : memref<1x1x16x2x128xf32, #tpu.memory_space<vmem>>, vector<1x1x1x2x128xf32>
    %151 = vector.shape_cast %150 : vector<1x1x1x2x128xf32> to vector<2x128xf32>
    %152 = arith.subf %151, %94 : vector<2x128xf32>
    %153 = math.exp %152 : vector<2x128xf32>
    %154 = arith.addf %146, %153 : vector<2x128xf32>
    %cst_191 = arith.constant 7.000000e+00 : f32
    %155 = vector.broadcast %cst_191 : f32 to vector<2x128xf32>
    %156 = arith.mulf %155, %153 : vector<2x128xf32>
    %157 = arith.addf %149, %156 : vector<2x128xf32>
    %c0_192 = arith.constant 0 : index
    %c0_193 = arith.constant 0 : index
    %c8_194 = arith.constant 8 : index
    %c0_195 = arith.constant 0 : index
    %c0_196 = arith.constant 0 : index
    %158 = vector.load %arg3[%c0_192, %c0_193, %c8_194, %c0_195, %c0_196] : memref<1x1x16x2x128xf32, #tpu.memory_space<vmem>>, vector<1x1x1x2x128xf32>
    %159 = vector.shape_cast %158 : vector<1x1x1x2x128xf32> to vector<2x128xf32>
    %160 = arith.subf %159, %94 : vector<2x128xf32>
    %161 = math.exp %160 : vector<2x128xf32>
    %162 = arith.addf %154, %161 : vector<2x128xf32>
    %cst_197 = arith.constant 8.000000e+00 : f32
    %163 = vector.broadcast %cst_197 : f32 to vector<2x128xf32>
    %164 = arith.mulf %163, %161 : vector<2x128xf32>
    %165 = arith.addf %157, %164 : vector<2x128xf32>
    %c0_198 = arith.constant 0 : index
    %c0_199 = arith.constant 0 : index
    %c9_200 = arith.constant 9 : index
    %c0_201 = arith.constant 0 : index
    %c0_202 = arith.constant 0 : index
    %166 = vector.load %arg3[%c0_198, %c0_199, %c9_200, %c0_201, %c0_202] : memref<1x1x16x2x128xf32, #tpu.memory_space<vmem>>, vector<1x1x1x2x128xf32>
    %167 = vector.shape_cast %166 : vector<1x1x1x2x128xf32> to vector<2x128xf32>
    %168 = arith.subf %167, %94 : vector<2x128xf32>
    %169 = math.exp %168 : vector<2x128xf32>
    %170 = arith.addf %162, %169 : vector<2x128xf32>
    %cst_203 = arith.constant 9.000000e+00 : f32
    %171 = vector.broadcast %cst_203 : f32 to vector<2x128xf32>
    %172 = arith.mulf %171, %169 : vector<2x128xf32>
    %173 = arith.addf %165, %172 : vector<2x128xf32>
    %c0_204 = arith.constant 0 : index
    %c0_205 = arith.constant 0 : index
    %c10_206 = arith.constant 10 : index
    %c0_207 = arith.constant 0 : index
    %c0_208 = arith.constant 0 : index
    %174 = vector.load %arg3[%c0_204, %c0_205, %c10_206, %c0_207, %c0_208] : memref<1x1x16x2x128xf32, #tpu.memory_space<vmem>>, vector<1x1x1x2x128xf32>
    %175 = vector.shape_cast %174 : vector<1x1x1x2x128xf32> to vector<2x128xf32>
    %176 = arith.subf %175, %94 : vector<2x128xf32>
    %177 = math.exp %176 : vector<2x128xf32>
    %178 = arith.addf %170, %177 : vector<2x128xf32>
    %cst_209 = arith.constant 1.000000e+01 : f32
    %179 = vector.broadcast %cst_209 : f32 to vector<2x128xf32>
    %180 = arith.mulf %179, %177 : vector<2x128xf32>
    %181 = arith.addf %173, %180 : vector<2x128xf32>
    %c0_210 = arith.constant 0 : index
    %c0_211 = arith.constant 0 : index
    %c11_212 = arith.constant 11 : index
    %c0_213 = arith.constant 0 : index
    %c0_214 = arith.constant 0 : index
    %182 = vector.load %arg3[%c0_210, %c0_211, %c11_212, %c0_213, %c0_214] : memref<1x1x16x2x128xf32, #tpu.memory_space<vmem>>, vector<1x1x1x2x128xf32>
    %183 = vector.shape_cast %182 : vector<1x1x1x2x128xf32> to vector<2x128xf32>
    %184 = arith.subf %183, %94 : vector<2x128xf32>
    %185 = math.exp %184 : vector<2x128xf32>
    %186 = arith.addf %178, %185 : vector<2x128xf32>
    %cst_215 = arith.constant 1.100000e+01 : f32
    %187 = vector.broadcast %cst_215 : f32 to vector<2x128xf32>
    %188 = arith.mulf %187, %185 : vector<2x128xf32>
    %189 = arith.addf %181, %188 : vector<2x128xf32>
    %c0_216 = arith.constant 0 : index
    %c0_217 = arith.constant 0 : index
    %c12_218 = arith.constant 12 : index
    %c0_219 = arith.constant 0 : index
    %c0_220 = arith.constant 0 : index
    %190 = vector.load %arg3[%c0_216, %c0_217, %c12_218, %c0_219, %c0_220] : memref<1x1x16x2x128xf32, #tpu.memory_space<vmem>>, vector<1x1x1x2x128xf32>
    %191 = vector.shape_cast %190 : vector<1x1x1x2x128xf32> to vector<2x128xf32>
    %192 = arith.subf %191, %94 : vector<2x128xf32>
    %193 = math.exp %192 : vector<2x128xf32>
    %194 = arith.addf %186, %193 : vector<2x128xf32>
    %cst_221 = arith.constant 1.200000e+01 : f32
    %195 = vector.broadcast %cst_221 : f32 to vector<2x128xf32>
    %196 = arith.mulf %195, %193 : vector<2x128xf32>
    %197 = arith.addf %189, %196 : vector<2x128xf32>
    %c0_222 = arith.constant 0 : index
    %c0_223 = arith.constant 0 : index
    %c13_224 = arith.constant 13 : index
    %c0_225 = arith.constant 0 : index
    %c0_226 = arith.constant 0 : index
    %198 = vector.load %arg3[%c0_222, %c0_223, %c13_224, %c0_225, %c0_226] : memref<1x1x16x2x128xf32, #tpu.memory_space<vmem>>, vector<1x1x1x2x128xf32>
    %199 = vector.shape_cast %198 : vector<1x1x1x2x128xf32> to vector<2x128xf32>
    %200 = arith.subf %199, %94 : vector<2x128xf32>
    %201 = math.exp %200 : vector<2x128xf32>
    %202 = arith.addf %194, %201 : vector<2x128xf32>
    %cst_227 = arith.constant 1.300000e+01 : f32
    %203 = vector.broadcast %cst_227 : f32 to vector<2x128xf32>
    %204 = arith.mulf %203, %201 : vector<2x128xf32>
    %205 = arith.addf %197, %204 : vector<2x128xf32>
    %c0_228 = arith.constant 0 : index
    %c0_229 = arith.constant 0 : index
    %c14_230 = arith.constant 14 : index
    %c0_231 = arith.constant 0 : index
    %c0_232 = arith.constant 0 : index
    %206 = vector.load %arg3[%c0_228, %c0_229, %c14_230, %c0_231, %c0_232] : memref<1x1x16x2x128xf32, #tpu.memory_space<vmem>>, vector<1x1x1x2x128xf32>
    %207 = vector.shape_cast %206 : vector<1x1x1x2x128xf32> to vector<2x128xf32>
    %208 = arith.subf %207, %94 : vector<2x128xf32>
    %209 = math.exp %208 : vector<2x128xf32>
    %210 = arith.addf %202, %209 : vector<2x128xf32>
    %cst_233 = arith.constant 1.400000e+01 : f32
    %211 = vector.broadcast %cst_233 : f32 to vector<2x128xf32>
    %212 = arith.mulf %211, %209 : vector<2x128xf32>
    %213 = arith.addf %205, %212 : vector<2x128xf32>
    %c0_234 = arith.constant 0 : index
    %c0_235 = arith.constant 0 : index
    %c15_236 = arith.constant 15 : index
    %c0_237 = arith.constant 0 : index
    %c0_238 = arith.constant 0 : index
    %214 = vector.load %arg3[%c0_234, %c0_235, %c15_236, %c0_237, %c0_238] : memref<1x1x16x2x128xf32, #tpu.memory_space<vmem>>, vector<1x1x1x2x128xf32>
    %215 = vector.shape_cast %214 : vector<1x1x1x2x128xf32> to vector<2x128xf32>
    %216 = arith.subf %215, %94 : vector<2x128xf32>
    %217 = math.exp %216 : vector<2x128xf32>
    %218 = arith.addf %210, %217 : vector<2x128xf32>
    %cst_239 = arith.constant 1.500000e+01 : f32
    %219 = vector.broadcast %cst_239 : f32 to vector<2x128xf32>
    %220 = arith.mulf %219, %217 : vector<2x128xf32>
    %221 = arith.addf %213, %220 : vector<2x128xf32>
    %222 = tpu.reciprocal %218 {approx = true} : vector<2x128xf32> -> vector<2x128xf32>
    %223 = arith.mulf %218, %222 : vector<2x128xf32>
    %cst_240 = arith.constant 2.000000e+00 : f32
    %224 = vector.broadcast %cst_240 : f32 to vector<2x128xf32>
    %225 = arith.subf %224, %223 : vector<2x128xf32>
    %226 = arith.mulf %222, %225 : vector<2x128xf32>
    %227 = arith.mulf %221, %226 : vector<2x128xf32>
    %c0_241 = arith.constant 0 : index
    %c0_242 = arith.constant 0 : index
    %c0_243 = arith.constant 0 : index
    %c0_244 = arith.constant 0 : index
    %228 = vector.load %arg5[%c0_241, %c0_242, %c0_243, %c0_244] : memref<1x1x2x128xf32, #tpu.memory_space<vmem>>, vector<1x1x2x128xf32>
    %229 = vector.shape_cast %228 : vector<1x1x2x128xf32> to vector<2x128xf32>
    %230 = vector.shape_cast %227 : vector<2x128xf32> to vector<1x1x2x128xf32>
    tpu.vector_store %arg5[%c0_241, %c0_242, %c0_243, %c0_244], %230 {strides = array<i32>} : memref<1x1x2x128xf32, #tpu.memory_space<vmem>>, vector<1x1x2x128xf32>,
    return
  }
  func.func @transform_0(%arg0: i32, %arg1: i32, %arg2: i32) -> (i32, i32, i32, i32, i32) {
    %c0_i32 = arith.constant 0 : i32
    %c0_i32_0 = arith.constant 0 : i32
    %c0_i32_1 = arith.constant 0 : i32
    return %arg0, %arg1, %c0_i32, %arg2, %c0_i32_0 : i32, i32, i32, i32, i32
  }
  func.func @transform_1(%arg0: i32, %arg1: i32, %arg2: i32) -> (i32, i32, i32, i32, i32) {
    %c0_i32 = arith.constant 0 : i32
    %c0_i32_0 = arith.constant 0 : i32
    %c0_i32_1 = arith.constant 0 : i32
    return %arg0, %c0_i32, %arg1, %arg2, %c0_i32_0 : i32, i32, i32, i32, i32
  }
  func.func @transform_2(%arg0: i32, %arg1: i32, %arg2: i32) -> (i32, i32, i32, i32) {
    %c0_i32 = arith.constant 0 : i32
    %c0_i32_0 = arith.constant 0 : i32
    return %arg0, %arg1, %arg2, %c0_i32 : i32, i32, i32, i32
  }
}

</mosaic_0001>

<llo_original>
// kernel: anchor2vec_forward.1
$region0: #{anchor2vec_forward.1}
  #allocation0 [shape = 'u32[]', space=smem, size = 0x4, offset = 0x4, fixed_abs, tag = 'smem constant byte address 0x4 - core index']
  #allocation1 [shape = 'u32[72,128]{1,0:T(1,128)}', space=vmem, size = 0x9000, scoped, tag = 'internal scratch']
  %s0 = inlined_call_operand.vmem [shape: f32[2,4,16,2,128], index: 0, kind: input, shape index: {}]
  %s1 = inlined_call_operand.vmem [shape: f32[2,16,4,2,128], index: 1, kind: output, shape index: {0}]
  %s2 = inlined_call_operand.vmem [shape: f32[2,4,2,128], index: 2, kind: output, shape index: {1}]
  %3 = xla_tuple %s1, %s2
  %s4 = sld [smem:[#allocation0]]
  $region82: #{anchor2vec_forward.1} parent=0
    _
  %s6 = ssub.s32 1, %s4
  %s7 = scalar_select 0, %s6, %s4
  $region1: #{anchor2vec_forward.1} parent=0
    #allocation2 [shape = 'u8[32768]{0}', space=vmem, size = 0x8000, scoped, tag = 'output window, operand 0']
    loop: start=0, step=1, limit=10
    $region2: #{anchor2vec_forward.1} parent=1 // loop_pre_header
      _
    $region3: #{anchor2vec_forward.1} parent=1 // loop_header
      %s9 = sphi 0, %s13
      %p10 = scmp.ge.s32.totalorder %s9, 10
      %s16 = sphi 0, %s35
      %s17 = sphi 0, %s31
      %s18 = sphi 0, %s27
      %s19 = sphi 0, %s16
      %s20 = sphi 0, %s17
      %s21 = sphi 0, %s18
      %s22 = sphi 0, %s19
      %s23 = sphi 0, %s20
      %s24 = sphi 0, %s21
      %s42 = sphi 0, %s44
      %s45 = sphi 0, %s42
      %s46 = sphi 0, %s45
      %s62 = sphi 0, %s46
      %s72 = sphi 0, %s74
      %s75 = sphi 0, %s72
      %s76 = sphi 0, %s75
      %s92 = sphi 0, %s76
      %s102 = sphi 0, %s104
      %s105 = sphi 0, %s102
      %s106 = sphi 0, %s105
      %s122 = sphi 0, %s106
    $region4: #{anchor2vec_forward.1} parent=1 // loop_header_branch
      %12 = sbr.rel (%p10) target = $region8
    $region5: #{anchor2vec_forward.1} parent=1 // loop_body
      %s14 = ssub.s32 %s9, 1
      %s15 = ssub.s32 %s9, 2
      %s25 = sadd.s32 1, %s18
      %p26 = scmp.ge.s32.totalorder %s25, 1
      %s27 = scalar_select %p26, 0, %s25
      %s28 = sadd.s32 1, %s17
      %s29 = scalar_select %p26, %s28, %s17
      %p30 = scmp.ge.s32.totalorder %s29, 4
      %s31 = scalar_select %p30, 0, %s29
      %s32 = sadd.s32 1, %s16
      %s33 = scalar_select %p30, %s32, %s16
      %p34 = scmp.ge.s32.totalorder %s33, 2
      %s35 = scalar_select %p34, 0, %s33
      %s36 = ssub.s32 %s16, %s35
      %s37 = ssub.s32 %s17, %s31
      %s38 = sor.u32 %s36, %s37
      %s39 = ssub.s32 %s18, %s27
      %s40 = sor.u32 %s38, %s39
      %p41 = scmp.eq.s32.totalorder %s40, 0
      %s43 = sadd.s32 %s42, 1
      %s44 = scalar_select %p41, %s42, %s43
      %p47 = pneg %p41
      %p48 = scmp.eq.s32.totalorder %s9, 7
      %p49 = por %p47, %p48
      %p50 = scmp.ne.s32.totalorder %s42, %s45
      %p51 = scmp.eq.s32.totalorder %s9, 0
      %p52 = por %p50, %p51
      %p53 = scmp.ne.s32.totalorder %s42, %s45
      %p54 = scmp.eq.s32.totalorder %s14, 7
      %p55 = por %p53, %p54
      %p56 = scmp.ne.s32.totalorder %s45, %s46
      %p57 = scmp.eq.s32.totalorder %s14, 0
      %p58 = por %p56, %p57
      %p59 = scmp.ne.s32.totalorder %s45, %s46
      %p60 = scmp.eq.s32.totalorder %s15, 7
      %p61 = por %p59, %p60
      %p63 = scmp.ne.s32.totalorder %s46, %s62
      %p64 = scmp.eq.s32.totalorder %s15, 0
      %p65 = por %p63, %p64
      %s66 = ssub.s32 %s16, %s35
      %s67 = ssub.s32 %s17, %s31
      %s68 = sor.u32 %s66, %s67
      %s69 = ssub.s32 %s18, %s27
      %s70 = sor.u32 %s68, %s69
      %p71 = scmp.eq.s32.totalorder %s70, 0
      %s73 = sadd.s32 %s72, 1
      %s74 = scalar_select %p71, %s72, %s73
      %p77 = pneg %p71
      %p78 = scmp.eq.s32.totalorder %s9, 7
      %p79 = por %p77, %p78
      %p80 = scmp.ne.s32.totalorder %s72, %s75
      %p81 = scmp.eq.s32.totalorder %s9, 0
      %p82 = por %p80, %p81
      %p83 = scmp.ne.s32.totalorder %s72, %s75
      %p84 = scmp.eq.s32.totalorder %s14, 7
      %p85 = por %p83, %p84
      %p86 = scmp.ne.s32.totalorder %s75, %s76
      %p87 = scmp.eq.s32.totalorder %s14, 0
      %p88 = por %p86, %p87
      %p89 = scmp.ne.s32.totalorder %s75, %s76
      %p90 = scmp.eq.s32.totalorder %s15, 7
      %p91 = por %p89, %p90
      %p93 = scmp.ne.s32.totalorder %s76, %s92
      %p94 = scmp.eq.s32.totalorder %s15, 0
      %p95 = por %p93, %p94
      %s96 = ssub.s32 %s16, %s35
      %s97 = ssub.s32 %s17, %s31
      %s98 = sor.u32 %s96, %s97
      %s99 = ssub.s32 %s18, %s27
      %s100 = sor.u32 %s98, %s99
      %p101 = scmp.eq.s32.totalorder %s100, 0
      %s103 = sadd.s32 %s102, 1
      %s104 = scalar_select %p101, %s102, %s103
      %p107 = pneg %p101
      %p108 = scmp.eq.s32.totalorder %s9, 7
      %p109 = por %p107, %p108
      %p110 = scmp.ne.s32.totalorder %s102, %s105
      %p111 = scmp.eq.s32.totalorder %s9, 0
      %p112 = por %p110, %p111
      %p113 = scmp.ne.s32.totalorder %s102, %s105
      %p114 = scmp.eq.s32.totalorder %s14, 7
      %p115 = por %p113, %p114
      %p116 = scmp.ne.s32.totalorder %s105, %s106
      %p117 = scmp.eq.s32.totalorder %s14, 0
      %p118 = por %p116, %p117
      %p119 = scmp.ne.s32.totalorder %s105, %s106
      %p120 = scmp.eq.s32.totalorder %s15, 7
      %p121 = por %p119, %p120
      %p123 = scmp.ne.s32.totalorder %s106, %s122
      %p124 = scmp.eq.s32.totalorder %s15, 0
      %p125 = por %p123, %p124
      %p126 = scmp.le.s32.totalorder 1, %s9
      %p127 = scmp.lt.s32.totalorder %s9, 9
      %p128 = pnand %p126, %p127
      %p129 = pneg %p128
      // Predicated region
      $region9: #{anchor2vec_forward.1} parent=5 // pred_check
        _
      $region10: #{anchor2vec_forward.1} parent=5 // pred_check_branch
        %131 = sbr.rel (%p128) target = $region12
      $region11: #{anchor2vec_forward.1} parent=5 // pred_region
        %s132 = ssub.s32 %s9, 1
      $region12: #{anchor2vec_forward.1} parent=5 // pred_fallthru
        _
      %p133 = scmp.lt.s32.totalorder %s9, 8
      // Predicated region
      $region13: #{anchor2vec_forward.1} parent=5 // pred_check
        %p134 = pneg %p133
      $region14: #{anchor2vec_forward.1} parent=5 // pred_check_branch
        %136 = sbr.rel (%p134) target = $region16
      $region15: #{anchor2vec_forward.1} parent=5 // pred_region
        // Predicated region
        $region17: #{anchor2vec_forward.1} parent=15 // pred_check
          %p137 = pneg %p52
        $region18: #{anchor2vec_forward.1} parent=15 // pred_check_branch
          %139 = sbr.rel (%p137) target = $region20
        $region19: #{anchor2vec_forward.1} parent=15 // pred_region
          %p140 = scmp.lt.s32.totalorder %s16, 1
          %s141 = scalar_select %p140, %s16, 1
          %p142 = scmp.lt.s32.totalorder %s17, 3
          %s143 = scalar_select %p142, %s17, 3
          %p144 = scmp.lt.s32.totalorder %s18, 0
          %s145 = scalar_select %p144, %s18, 0
          %s146 = smul.addr %s143, 16
          %s147 = sadd.s32 %s145, %s146
          %s148 = smul.addr %s141, 64
          %s149 = sadd.s32 %s147, %s148
          %s150 = smul.addr %s149, 2
          %s151 = scalar_lea.vmem %s0, %s150
        $region20: #{anchor2vec_forward.1} parent=15 // pred_fallthru
          _
      $region16: #{anchor2vec_forward.1} parent=5 // pred_fallthru
        _
      %p152 = scmp.le.s32.totalorder 1, %s9
      %p153 = scmp.lt.s32.totalorder %s9, 9
      %p154 = pnand %p152, %p153
      %p155 = pneg %p154
      // Predicated region
      $region21: #{anchor2vec_forward.1} parent=5 // pred_check
        _
      $region22: #{anchor2vec_forward.1} parent=5 // pred_check_branch
        %157 = sbr.rel (%p154) target = $region24
      $region23: #{anchor2vec_forward.1} parent=5 // pred_region
        %s158 = ssub.s32 %s9, 1
        %p159 = scmp.lt.s32.totalorder %s19, 1
        %s160 = scalar_select %p159, %s19, 1
        %p161 = scmp.lt.s32.totalorder %s20, 3
        %s162 = scalar_select %p161, %s20, 3
        %p163 = scmp.lt.s32.totalorder %s21, 0
        %s164 = scalar_select %p163, %s21, 0
        %s165 = smul.addr %s162, 16
        %s166 = sadd.s32 %s164, %s165
        %s167 = smul.addr %s160, 64
        %s168 = sadd.s32 %s166, %s167
        %s169 = smul.addr %s168, 2
        %s170 = scalar_lea.vmem %s0, %s169
        %p171 = pneg %p58
        %p172 = pneg %p55
        %p173 = pneg %p88
        %p174 = pneg %p85
        %s175 = sand.u32 %s75, 1
        %s176 = sand.u32 %s75, 1
        %s177 = smul.addr %s176, 32
        %s178 = scalar_lea.vmem [#allocation2], %s177
        %p179 = pneg %p118
        %p180 = pneg %p115
        %p181 = scmp.lt.s32.totalorder %s19, 1
        %s182 = scalar_select %p181, %s19, 1
        %p183 = scmp.lt.s32.totalorder %s20, 3
        %s184 = scalar_select %p183, %s20, 3
        %p185 = scmp.lt.s32.totalorder %s21, 0
        %s186 = scalar_select %p185, %s21, 0
        %s187 = sadd.s32 %s186, %s184
        %s188 = smul.addr %s182, 4
        %s189 = sadd.s32 %s187, %s188
        %s190 = smul.addr %s189, 2
        %s191 = scalar_lea.vmem %s2, %s190
        %p192 = scmp.lt.s32.totalorder %s19, 1
        %s193 = scalar_select %p192, %s19, 1
        %p194 = scmp.lt.s32.totalorder %s20, 3
        %s195 = scalar_select %p194, %s20, 3
        %p196 = scmp.lt.s32.totalorder %s21, 0
        %s197 = scalar_select %p196, %s21, 0
        %s198 = smul.addr %s195, 16
        %s199 = sadd.s32 %s197, %s198
        %s200 = smul.addr %s193, 64
        %s201 = sadd.s32 %s199, %s200
        %s202 = smul.addr %s201, 2
        %s203 = scalar_lea.vmem %s0, %s202
        %p204 = scmp.lt.s32.totalorder %s19, 1
        %s205 = scalar_select %p204, %s19, 1
        %p206 = scmp.lt.s32.totalorder %s20, 3
        %s207 = scalar_select %p206, %s20, 3
        %p208 = scmp.lt.s32.totalorder %s21, 0
        %s209 = scalar_select %p208, %s21, 0
        %s210 = sadd.s32 %s209, %s207
        %s211 = smul.addr %s205, 4
        %s212 = sadd.s32 %s210, %s211
        %s213 = smul.addr %s212, 2
        %s214 = scalar_lea.vmem %s2, %s213
        %v215 = vld [vmem:[%s203] sm:$0x3]
        %216 = vst [vmem:[%s178] sm:$0x3] %v215
        %s217 = scalar_lea.vmem %s203, 2
        %v218 = vld [vmem:[%s217] sm:$0x3]
        %s219 = scalar_lea.vmem %s178, 2 [#allocation2]
        %220 = vst [vmem:[%s219] sm:$0x3] %v218
        %v221 = vmax.f32 %v215, %v218
        %s222 = scalar_lea.vmem %s203, 4
        %v223 = vld [vmem:[%s222] sm:$0x3]
        %s224 = scalar_lea.vmem %s178, 4 [#allocation2]
        %225 = vst [vmem:[%s224] sm:$0x3] %v223
        %v226 = vmax.f32 %v221, %v223
        %s227 = scalar_lea.vmem %s203, 6
        %v228 = vld [vmem:[%s227] sm:$0x3]
        %s229 = scalar_lea.vmem %s178, 6 [#allocation2]
        %230 = vst [vmem:[%s229] sm:$0x3] %v228
        %v231 = vmax.f32 %v226, %v228
        %s232 = scalar_lea.vmem %s203, 8
        %v233 = vld [vmem:[%s232] sm:$0x3]
        %s234 = scalar_lea.vmem %s178, 8 [#allocation2]
        %235 = vst [vmem:[%s234] sm:$0x3] %v233
        %v236 = vmax.f32 %v231, %v233
        %s237 = scalar_lea.vmem %s203, 10
        %v238 = vld [vmem:[%s237] sm:$0x3]
        %s239 = scalar_lea.vmem %s178, 10 [#allocation2]
        %240 = vst [vmem:[%s239] sm:$0x3] %v238
        %v241 = vmax.f32 %v236, %v238
        %s242 = scalar_lea.vmem %s203, 12
        %v243 = vld [vmem:[%s242] sm:$0x3]
        %s244 = scalar_lea.vmem %s178, 12 [#allocation2]
        %245 = vst [vmem:[%s244] sm:$0x3] %v243
        %v246 = vmax.f32 %v241, %v243
        %s247 = scalar_lea.vmem %s203, 14
        %v248 = vld [vmem:[%s247] sm:$0x3]
        %s249 = scalar_lea.vmem %s178, 14 [#allocation2]
        %250 = vst [vmem:[%s249] sm:$0x3] %v248
        %v251 = vmax.f32 %v246, %v248
        %s252 = scalar_lea.vmem %s203, 16
        %v253 = vld [vmem:[%s252] sm:$0x3]
        %s254 = scalar_lea.vmem %s178, 16 [#allocation2]
        %255 = vst [vmem:[%s254] sm:$0x3] %v253
        %v256 = vmax.f32 %v251, %v253
        %s257 = scalar_lea.vmem %s203, 18
        %v258 = vld [vmem:[%s257] sm:$0x3]
        %s259 = scalar_lea.vmem %s178, 18 [#allocation2]
        %260 = vst [vmem:[%s259] sm:$0x3] %v258
        %v261 = vmax.f32 %v256, %v258
        %s262 = scalar_lea.vmem %s203, 20
        %v263 = vld [vmem:[%s262] sm:$0x3]
        %s264 = scalar_lea.vmem %s178, 20 [#allocation2]
        %265 = vst [vmem:[%s264] sm:$0x3] %v263
        %v266 = vmax.f32 %v261, %v263
        %s267 = scalar_lea.vmem %s203, 22
        %v268 = vld [vmem:[%s267] sm:$0x3]
        %s269 = scalar_lea.vmem %s178, 22 [#allocation2]
        %270 = vst [vmem:[%s269] sm:$0x3] %v268
        %v271 = vmax.f32 %v266, %v268
        %s272 = scalar_lea.vmem %s203, 24
        %v273 = vld [vmem:[%s272] sm:$0x3]
        %s274 = scalar_lea.vmem %s178, 24 [#allocation2]
        %275 = vst [vmem:[%s274] sm:$0x3] %v273
        %v276 = vmax.f32 %v271, %v273
        %s277 = scalar_lea.vmem %s203, 26
        %v278 = vld [vmem:[%s277] sm:$0x3]
        %s279 = scalar_lea.vmem %s178, 26 [#allocation2]
        %280 = vst [vmem:[%s279] sm:$0x3] %v278
        %v281 = vmax.f32 %v276, %v278
        %s282 = scalar_lea.vmem %s203, 28
        %v283 = vld [vmem:[%s282] sm:$0x3]
        %s284 = scalar_lea.vmem %s178, 28 [#allocation2]
        %285 = vst [vmem:[%s284] sm:$0x3] %v283
        %v286 = vmax.f32 %v281, %v283
        %s287 = scalar_lea.vmem %s203, 30
        %v288 = vld [vmem:[%s287] sm:$0x3]
        %s289 = scalar_lea.vmem %s178, 30 [#allocation2]
        %290 = vst [vmem:[%s289] sm:$0x3] %v288
        %v291 = vmax.f32 %v286, %v288
        %v292 = vld [vmem:[%s203] sm:$0x3]
        %v293 = vsub.f32 %v292, %v291
        %v294 = vmul.f32 %v293, 1.442695
        %v295 = vpow.pop %v294
        %v296 = vadd.f32 %v295, 0.0
        %v297 = vld [vmem:[%s217] sm:$0x3]
        %v298 = vsub.f32 %v297, %v291
        %v299 = vmul.f32 %v298, 1.442695
        %v300 = vpow.pop %v299
        %v301 = vadd.f32 %v296, %v300
        %v302 = vadd.f32 %v300, 0.0
        %v303 = vld [vmem:[%s222] sm:$0x3]
        %v304 = vsub.f32 %v303, %v291
        %v305 = vmul.f32 %v304, 1.442695
        %v306 = vpow.pop %v305
        %v307 = vadd.f32 %v301, %v306
        %v308 = vmul.f32 %v306, 2.0
        %v309 = vadd.f32 %v302, %v308
        %v310 = vld [vmem:[%s227] sm:$0x3]
        %v311 = vsub.f32 %v310, %v291
        %v312 = vmul.f32 %v311, 1.442695
        %v313 = vpow.pop %v312
        %v314 = vadd.f32 %v307, %v313
        %v315 = vmul.f32 %v313, 3.0
        %v316 = vadd.f32 %v309, %v315
        %v317 = vld [vmem:[%s232] sm:$0x3]
        %v318 = vsub.f32 %v317, %v291
        %v319 = vmul.f32 %v318, 1.442695
        %v320 = vpow.pop %v319
        %v321 = vadd.f32 %v314, %v320
        %v322 = vmul.f32 %v320, 4.0
        %v323 = vadd.f32 %v316, %v322
        %v324 = vld [vmem:[%s237] sm:$0x3]
        %v325 = vsub.f32 %v324, %v291
        %v326 = vmul.f32 %v325, 1.442695
        %v327 = vpow.pop %v326
        %v328 = vadd.f32 %v321, %v327
        %v329 = vmul.f32 %v327, 5.0
        %v330 = vadd.f32 %v323, %v329
        %v331 = vld [vmem:[%s242] sm:$0x3]
        %v332 = vsub.f32 %v331, %v291
        %v333 = vmul.f32 %v332, 1.442695
        %v334 = vpow.pop %v333
        %v335 = vadd.f32 %v328, %v334
        %v336 = vmul.f32 %v334, 6.0
        %v337 = vadd.f32 %v330, %v336
        %v338 = vld [vmem:[%s247] sm:$0x3]
        %v339 = vsub.f32 %v338, %v291
        %v340 = vmul.f32 %v339, 1.442695
        %v341 = vpow.pop %v340
        %v342 = vadd.f32 %v335, %v341
        %v343 = vmul.f32 %v341, 7.0
        %v344 = vadd.f32 %v337, %v343
        %v345 = vld [vmem:[%s252] sm:$0x3]
        %v346 = vsub.f32 %v345, %v291
        %v347 = vmul.f32 %v346, 1.442695
        %v348 = vpow.pop %v347
        %v349 = vadd.f32 %v342, %v348
        %v350 = vmul.f32 %v348, 8.0
        %v351 = vadd.f32 %v344, %v350
        %v352 = vld [vmem:[%s257] sm:$0x3]
        %v353 = vsub.f32 %v352, %v291
        %v354 = vmul.f32 %v353, 1.442695
        %v355 = vpow.pop %v354
        %v356 = vadd.f32 %v349, %v355
        %v357 = vmul.f32 %v355, 9.0
        %v358 = vadd.f32 %v351, %v357
        %v359 = vld [vmem:[%s262] sm:$0x3]
        %v360 = vsub.f32 %v359, %v291
        %v361 = vmul.f32 %v360, 1.442695
        %v362 = vpow.pop %v361
        %v363 = vadd.f32 %v356, %v362
        %v364 = vmul.f32 %v362, 10.0
        %v365 = vadd.f32 %v358, %v364
        %v366 = vld [vmem:[%s267] sm:$0x3]
        %v367 = vsub.f32 %v366, %v291
        %v368 = vmul.f32 %v367, 1.442695
        %v369 = vpow.pop %v368
        %v370 = vadd.f32 %v363, %v369
        %v371 = vmul.f32 %v369, 11.0
        %v372 = vadd.f32 %v365, %v371
        %v373 = vld [vmem:[%s272] sm:$0x3]
        %v374 = vsub.f32 %v373, %v291
        %v375 = vmul.f32 %v374, 1.442695
        %v376 = vpow.pop %v375
        %v377 = vadd.f32 %v370, %v376
        %v378 = vmul.f32 %v376, 12.0
        %v379 = vadd.f32 %v372, %v378
        %v380 = vld [vmem:[%s277] sm:$0x3]
        %v381 = vsub.f32 %v380, %v291
        %v382 = vmul.f32 %v381, 1.442695
        %v383 = vpow.pop %v382
        %v384 = vadd.f32 %v377, %v383
        %v385 = vmul.f32 %v383, 13.0
        %v386 = vadd.f32 %v379, %v385
        %v387 = vld [vmem:[%s282] sm:$0x3]
        %v388 = vsub.f32 %v387, %v291
        %v389 = vmul.f32 %v388, 1.442695
        %v390 = vpow.pop %v389
        %v391 = vadd.f32 %v384, %v390
        %v392 = vmul.f32 %v390, 14.0
        %v393 = vadd.f32 %v386, %v392
        %v394 = vld [vmem:[%s287] sm:$0x3]
        %v395 = vsub.f32 %v394, %v291
        %v396 = vmul.f32 %v395, 1.442695
        %v397 = vpow.pop %v396
        %v398 = vadd.f32 %v391, %v397
        %v399 = vmul.f32 %v397, 15.0
        %v400 = vadd.f32 %v393, %v399
        %v401 = vrcp.pop %v398
        %v402 = vmul.f32 %v398, %v401
        %v403 = vsub.f32 2.0, %v402
        %v404 = vmul.f32 %v401, %v403
        %v405 = vmul.f32 %v400, %v404
        %406 = vst [vmem:[%s214] sm:$0x3] %v405
        %s407 = sand.u32 %s75, 1
        %s408 = sand.u32 %s75, 1
        %s409 = smul.addr %s408, 32
        %s410 = scalar_lea.vmem [#allocation2], %s409
        %p411 = scmp.lt.s32.totalorder %s19, 1
        %s412 = scalar_select %p411, %s19, 1
        %p413 = scmp.lt.s32.totalorder %s20, 3
        %s414 = scalar_select %p413, %s20, 3
        %p415 = scmp.lt.s32.totalorder %s21, 0
        %s416 = scalar_select %p415, %s21, 0
        %s417 = sadd.s32 %s416, %s414
        %s418 = smul.addr %s412, 4
        %s419 = sadd.s32 %s417, %s418
        %s420 = smul.addr %s419, 2
        %s421 = scalar_lea.vmem %s2, %s420
        // Predicated region
        $region25: #{anchor2vec_forward.1} parent=23 // pred_check
          %p422 = pneg %p85
        $region26: #{anchor2vec_forward.1} parent=23 // pred_check_branch
          %424 = sbr.rel (%p422) target = $region28
        $region27: #{anchor2vec_forward.1} parent=23 // pred_region
          %s425 = sadd.s32 %s21, %s20
          %s426 = smul.addr %s19, 64
          %s427 = sadd.s32 %s425, %s426
          %s428 = smul.addr %s427, 2
          %s429 = scalar_lea.vmem %s1, %s428
          // Predicated region
          $region29: #{anchor2vec_forward.1} parent=27 // pred_check
            _
          $region30: #{anchor2vec_forward.1} parent=27 // pred_check_branch
            %431 = sbr.rel (0) target = $region32
          $region31: #{anchor2vec_forward.1} parent=27 // pred_region
            // Predicated region
            $region33: #{anchor2vec_forward.1} parent=31 // pred_check
              _
            $region34: #{anchor2vec_forward.1} parent=31 // pred_check_branch
              %433 = sbr.rel target = $region36
            $region35: #{anchor2vec_forward.1} parent=31 // pred_region
              // Predicated region
              $region48: #{anchor2vec_forward.1} parent=35 // pred_check
                _
              $region49: #{anchor2vec_forward.1} parent=35 // pred_check_branch
                %479 = sbr.rel (0) target = $region51
              $region50: #{anchor2vec_forward.1} parent=35 // pred_region
                loop: start=0, step=1, limit=1
                $region52: #{anchor2vec_forward.1} parent=50 // loop_pre_header
                  _
                $region53: #{anchor2vec_forward.1} parent=50 // loop_header
                  %s481 = sphi 0, %s485
                  %p482 = scmp.ge.s32.totalorder %s481, 1
                  %s486 = sphi %s410, %s410
                  %s487 = sphi %s429, %s429
                $region54: #{anchor2vec_forward.1} parent=50 // loop_header_branch
                  %484 = sbr.rel (%p482) target = $region58
                $region55: #{anchor2vec_forward.1} parent=50 // loop_body
                  _
                $region56: #{anchor2vec_forward.1} parent=50 // loop_footer
                  %s485 = sadd.s32 1, %s481
                $region57: #{anchor2vec_forward.1} parent=50 // loop_footer_branch
                  %480 = sbr.rel target = $region53
                $region58: #{anchor2vec_forward.1} parent=50 // loop_exit
                  _
                %s489 = ssub.s32 4, 1
                loop: start=0, step=1, limit=1
                $region59: #{anchor2vec_forward.1} parent=50 // loop_pre_header
                  _
                $region60: #{anchor2vec_forward.1} parent=50 // loop_header
                  %s491 = sphi 0, %s495
                  %p492 = scmp.ge.s32.totalorder %s491, 1
                  %s496 = sphi %s410, %s410
                  %s497 = sphi %s429, %s429
                $region61: #{anchor2vec_forward.1} parent=50 // loop_header_branch
                  %494 = sbr.rel (%p492) target = $region65
                $region62: #{anchor2vec_forward.1} parent=50 // loop_body
                  %v498 = vld [vmem:[%s496] sm:%s489]
                  %499 = vst [vmem:[%s497] sm:%s489] %v498
                  %v500 = vld [vmem:[%s496 + $0x2] sm:%s489]
                  %501 = vst [vmem:[%s497 + $0x8] sm:%s489] %v500
                  %v502 = vld [vmem:[%s496 + $0x4] sm:%s489]
                  %503 = vst [vmem:[%s497 + $0x10] sm:%s489] %v502
                  %v504 = vld [vmem:[%s496 + $0x6] sm:%s489]
                  %505 = vst [vmem:[%s497 + $0x18] sm:%s489] %v504
                  %v506 = vld [vmem:[%s496 + $0x8] sm:%s489]
                  %507 = vst [vmem:[%s497 + $0x20] sm:%s489] %v506
                  %v508 = vld [vmem:[%s496 + $0xa] sm:%s489]
                  %509 = vst [vmem:[%s497 + $0x28] sm:%s489] %v508
                  %v510 = vld [vmem:[%s496 + $0xc] sm:%s489]
                  %511 = vst [vmem:[%s497 + $0x30] sm:%s489] %v510
                  %v512 = vld [vmem:[%s496 + $0xe] sm:%s489]
                  %513 = vst [vmem:[%s497 + $0x38] sm:%s489] %v512
                  %v514 = vld [vmem:[%s496 + $0x10] sm:%s489]
                  %515 = vst [vmem:[%s497 + $0x40] sm:%s489] %v514
                  %v516 = vld [vmem:[%s496 + $0x12] sm:%s489]
                  %517 = vst [vmem:[%s497 + $0x48] sm:%s489] %v516
                  %v518 = vld [vmem:[%s496 + $0x14] sm:%s489]
                  %519 = vst [vmem:[%s497 + $0x50] sm:%s489] %v518
                  %v520 = vld [vmem:[%s496 + $0x16] sm:%s489]
                  %521 = vst [vmem:[%s497 + $0x58] sm:%s489] %v520
                  %v522 = vld [vmem:[%s496 + $0x18] sm:%s489]
                  %523 = vst [vmem:[%s497 + $0x60] sm:%s489] %v522
                  %v524 = vld [vmem:[%s496 + $0x1a] sm:%s489]
                  %525 = vst [vmem:[%s497 + $0x68] sm:%s489] %v524
                  %v526 = vld [vmem:[%s496 + $0x1c] sm:%s489]
                  %527 = vst [vmem:[%s497 + $0x70] sm:%s489] %v526
                  %v528 = vld [vmem:[%s496 + $0x1e] sm:%s489]
                  %529 = vst [vmem:[%s497 + $0x78] sm:%s489] %v528
                $region63: #{anchor2vec_forward.1} parent=50 // loop_footer
                  %s495 = sadd.s32 1, %s491
                $region64: #{anchor2vec_forward.1} parent=50 // loop_footer_branch
                  %490 = sbr.rel target = $region60
                $region65: #{anchor2vec_forward.1} parent=50 // loop_exit
                  _
              $region51: #{anchor2vec_forward.1} parent=35 // pred_fallthru
                _
            $region36: #{anchor2vec_forward.1} parent=31 // pred_fallthru
              _
            // Predicated region
            $region37: #{anchor2vec_forward.1} parent=31 // pred_check
              _
            $region38: #{anchor2vec_forward.1} parent=31 // pred_check_branch
              %435 = sbr.rel (0) target = $region40
            $region39: #{anchor2vec_forward.1} parent=31 // pred_region
              %s437 = ssub.s32 4, 1
              loop: start=0, step=1, limit=1
              $region41: #{anchor2vec_forward.1} parent=39 // loop_pre_header
                _
              $region42: #{anchor2vec_forward.1} parent=39 // loop_header
                %s439 = sphi 0, %s443
                %p440 = scmp.ge.s32.totalorder %s439, 1
                %s444 = sphi %s410, %s410
                %s445 = sphi %s429, %s429
              $region43: #{anchor2vec_forward.1} parent=39 // loop_header_branch
                %442 = sbr.rel (%p440) target = $region47
              $region44: #{anchor2vec_forward.1} parent=39 // loop_body
                %v446 = vld [vmem:[%s444] sm:%s437]
                %447 = vst [vmem:[%s445] sm:%s437] %v446
                %v448 = vld [vmem:[%s444 + $0x2] sm:%s437]
                %449 = vst [vmem:[%s445 + $0x8] sm:%s437] %v448
                %v450 = vld [vmem:[%s444 + $0x4] sm:%s437]
                %451 = vst [vmem:[%s445 + $0x10] sm:%s437] %v450
                %v452 = vld [vmem:[%s444 + $0x6] sm:%s437]
                %453 = vst [vmem:[%s445 + $0x18] sm:%s437] %v452
                %v454 = vld [vmem:[%s444 + $0x8] sm:%s437]
                %455 = vst [vmem:[%s445 + $0x20] sm:%s437] %v454
                %v456 = vld [vmem:[%s444 + $0xa] sm:%s437]
                %457 = vst [vmem:[%s445 + $0x28] sm:%s437] %v456
                %v458 = vld [vmem:[%s444 + $0xc] sm:%s437]
                %459 = vst [vmem:[%s445 + $0x30] sm:%s437] %v458
                %v460 = vld [vmem:[%s444 + $0xe] sm:%s437]
                %461 = vst [vmem:[%s445 + $0x38] sm:%s437] %v460
                %v462 = vld [vmem:[%s444 + $0x10] sm:%s437]
                %463 = vst [vmem:[%s445 + $0x40] sm:%s437] %v462
                %v464 = vld [vmem:[%s444 + $0x12] sm:%s437]
                %465 = vst [vmem:[%s445 + $0x48] sm:%s437] %v464
                %v466 = vld [vmem:[%s444 + $0x14] sm:%s437]
                %467 = vst [vmem:[%s445 + $0x50] sm:%s437] %v466
                %v468 = vld [vmem:[%s444 + $0x16] sm:%s437]
                %469 = vst [vmem:[%s445 + $0x58] sm:%s437] %v468
                %v470 = vld [vmem:[%s444 + $0x18] sm:%s437]
                %471 = vst [vmem:[%s445 + $0x60] sm:%s437] %v470
                %v472 = vld [vmem:[%s444 + $0x1a] sm:%s437]
                %473 = vst [vmem:[%s445 + $0x68] sm:%s437] %v472
                %v474 = vld [vmem:[%s444 + $0x1c] sm:%s437]
                %475 = vst [vmem:[%s445 + $0x70] sm:%s437] %v474
                %v476 = vld [vmem:[%s444 + $0x1e] sm:%s437]
                %477 = vst [vmem:[%s445 + $0x78] sm:%s437] %v476
              $region45: #{anchor2vec_forward.1} parent=39 // loop_footer
                %s443 = sadd.s32 1, %s439
              $region46: #{anchor2vec_forward.1} parent=39 // loop_footer_branch
                %438 = sbr.rel target = $region42
              $region47: #{anchor2vec_forward.1} parent=39 // loop_exit
                _
            $region40: #{anchor2vec_forward.1} parent=31 // pred_fallthru
              _
          $region32: #{anchor2vec_forward.1} parent=27 // pred_fallthru
            _
          %530 = vnop
        $region28: #{anchor2vec_forward.1} parent=23 // pred_fallthru
          _
        // Predicated region
        $region66: #{anchor2vec_forward.1} parent=23 // pred_check
          %p531 = pneg %p115
        $region67: #{anchor2vec_forward.1} parent=23 // pred_check_branch
          %533 = sbr.rel (%p531) target = $region69
        $region68: #{anchor2vec_forward.1} parent=23 // pred_region
          _
        $region69: #{anchor2vec_forward.1} parent=23 // pred_fallthru
          _
      $region24: #{anchor2vec_forward.1} parent=5 // pred_fallthru
        _
      %p534 = scmp.le.s32.totalorder 2, %s9
      // Predicated region
      $region70: #{anchor2vec_forward.1} parent=5 // pred_check
        %p535 = pneg %p534
      $region71: #{anchor2vec_forward.1} parent=5 // pred_check_branch
        %537 = sbr.rel (%p535) target = $region73
      $region72: #{anchor2vec_forward.1} parent=5 // pred_region
        %s538 = ssub.s32 %s9, 2
        // Predicated region
        $region74: #{anchor2vec_forward.1} parent=72 // pred_check
          %p539 = pneg %p91
        $region75: #{anchor2vec_forward.1} parent=72 // pred_check_branch
          %541 = sbr.rel (%p539) target = $region77
        $region76: #{anchor2vec_forward.1} parent=72 // pred_region
          %s542 = sand.u32 %s76, 1
          %s543 = sand.u32 %s76, 1
          %s544 = smul.addr %s543, 32
          %s545 = scalar_lea.vmem [#allocation2], %s544
        $region77: #{anchor2vec_forward.1} parent=72 // pred_fallthru
          _
        // Predicated region
        $region78: #{anchor2vec_forward.1} parent=72 // pred_check
          %p546 = pneg %p121
        $region79: #{anchor2vec_forward.1} parent=72 // pred_check_branch
          %548 = sbr.rel (%p546) target = $region81
        $region80: #{anchor2vec_forward.1} parent=72 // pred_region
          %p549 = scmp.lt.s32.totalorder %s22, 1
          %s550 = scalar_select %p549, %s22, 1
          %p551 = scmp.lt.s32.totalorder %s23, 3
          %s552 = scalar_select %p551, %s23, 3
          %p553 = scmp.lt.s32.totalorder %s24, 0
          %s554 = scalar_select %p553, %s24, 0
          %s555 = sadd.s32 %s554, %s552
          %s556 = smul.addr %s550, 4
          %s557 = sadd.s32 %s555, %s556
          %s558 = smul.addr %s557, 2
          %s559 = scalar_lea.vmem %s2, %s558
        $region81: #{anchor2vec_forward.1} parent=72 // pred_fallthru
          _
      $region73: #{anchor2vec_forward.1} parent=5 // pred_fallthru
        _
    $region6: #{anchor2vec_forward.1} parent=1 // loop_footer
      %s13 = sadd.s32 1, %s9
    $region7: #{anchor2vec_forward.1} parent=1 // loop_footer_branch
      %8 = sbr.rel target = $region3
    $region8: #{anchor2vec_forward.1} parent=1 // loop_exit
      _

</llo_original>
